<compile_context>
chip_gen: v7x
topology: tpu7x:2x2x1
jax: 0.10.0
libtpu: 0.0.40
codegen_flags: <defaults>
</compile_context>

<pallas_src>
import math

import jax
import jax.numpy as jnp
from jax.experimental import pallas as pl
from jax.experimental.pallas import tpu as pltpu


# ---------------------------------------------------------------------------
# Tiling policy
# ---------------------------------------------------------------------------
_BATCH_TILE = 256                       # rows per batch block (multiple of 8)
_MAX_BLOCK_BYTES = 4 * 1024 * 1024      # per logits buffer (x2 when double-buffered)
_VMEM_LIMIT_BYTES = 32 * 1024 * 1024    # safe on v5e / v6e / v7x
_GRIDLESS_MAX_BYTES = 4 * 1024 * 1024   # whole-array-in-VMEM threshold


def _pick_tiles(bf, v, itemsize):
    """Choose (batch_tile, vocab_tile) for the tiled path."""
    b_tile = bf if bf <= _BATCH_TILE else _BATCH_TILE
    # Largest lane-dense (multiple of 128) vocab tile that fits the per-block
    # byte budget and does not exceed the vocab itself.
    budget = max(128, (_MAX_BLOCK_BYTES // (b_tile * itemsize)) // 128 * 128)
    v_cap = (v // 128) * 128 if v >= 128 else v   # == full dim is also legal
    v_tile = min(budget, v_cap)
    return b_tile, v_tile


# ---------------------------------------------------------------------------
# Kernels
# ---------------------------------------------------------------------------
def _row_max_first_argmax(x):
    """Row-wise (max, first index attaining it) of a (B, T) f32 tile."""
    m = jnp.max(x, axis=-1, keepdims=True)                                   # (B,1)
    col = jax.lax.broadcasted_iota(jnp.int32, x.shape, 1).astype(jnp.float32)
    # Smallest column attaining the max; +inf never wins the min. Exact for
    # column indices < 2^24 (asserted in the wrapper).
    arg = jnp.min(jnp.where(x == m, col, jnp.inf), axis=-1, keepdims=True)
    return m, arg.astype(jnp.int32)


def _greedy_full_kernel(logits_ref, token_ref):
    # Grid-less: whole (Bf, V) logits resident in VMEM; single shot.
    x = logits_ref[...].astype(jnp.float32)
    _, arg = _row_max_first_argmax(x)
    token_ref[...] = arg


def _make_tiled_kernel(v, v_tile):
    """Tiled kernel; grid = (batch tiles ["parallel"], vocab tiles ["arbitrary"])."""
    needs_tail_mask = (v % v_tile) != 0

    def kernel(logits_ref, token_ref, m_sc, i_sc):
        k = pl.program_id(1)

        @pl.when(k == 0)
        def _():
            m_sc[...] = jnp.full_like(m_sc, -jnp.inf)
            i_sc[...] = jnp.zeros_like(i_sc)

        x = logits_ref[...].astype(jnp.float32)          # (b_tile, v_tile)

        if needs_tail_mask:
            # Ragged vocab tail handled in-kernel: lanes with global column >= V
            # (garbage from the partial last block) are forced to -inf.
            col = jax.lax.broadcasted_iota(jnp.int32, x.shape, 1)
            x = jnp.where(k * v_tile + col < v, x, -jnp.inf)

        local_max, local_arg = _row_max_first_argmax(x)
        local_arg = local_arg + k * v_tile               # global column index

        # Strict '>' keeps the earliest global index on ties across vocab tiles.
        better = local_max > m_sc[...]
        i_sc[...] = jnp.where(better, local_arg, i_sc[...])
        m_sc[...] = jnp.where(better, local_max, m_sc[...])

        @pl.when(k == pl.num_programs(1) - 1)
        def _():
            token_ref[...] = i_sc[...]

    return kernel


# ---------------------------------------------------------------------------
# Wrapper
# ---------------------------------------------------------------------------
def greedy_head(m_logits, *, gridless_max_bytes=_GRIDLESS_MAX_BYTES):
    """token = argmax over the last dim of m_logits; shape (*leading, 1), int32."""
    *lead, v = m_logits.shape
    if v >= (1 << 24):
        raise ValueError("vocab too large for exact f32 index trick (V >= 2^24)")
    bf = int(math.prod(lead)) if lead else 1
    x2d = m_logits.reshape(bf, v)                        # metadata-only reshape
    itemsize = jnp.dtype(x2d.dtype).itemsize
    footprint = bf * v * itemsize

    if footprint <= gridless_max_bytes:
        # Grid-less: whole array in VMEM, no pipeline machinery.
        token = pl.pallas_call(
            _greedy_full_kernel,
            out_shape=jax.ShapeDtypeStruct((bf, 1), jnp.int32),
            in_specs=[pl.BlockSpec(memory_space=pltpu.MemorySpace.VMEM)],
            out_specs=pl.BlockSpec(memory_space=pltpu.MemorySpace.VMEM),
        )(x2d)
    else:
        b_tile, v_tile = _pick_tiles(bf, v, itemsize)
        grid_b = pl.cdiv(bf, b_tile)
        grid_v = pl.cdiv(v, v_tile)
        # TODO(synk): for Bf==1 decode on v7x, split the vocab into 2 "parallel"
        # halves with per-half (max, argmax) partial outputs + a tiny combine
        # epilogue to use both TensorCores.
        # TODO(synk): bump pipeline_mode=pl.Buffered(3) on the logits spec only
        # if a trace shows exposed DMA for very small Bf.
        token = pl.pallas_call(
            _make_tiled_kernel(v, v_tile),
            out_shape=jax.ShapeDtypeStruct((bf, 1), jnp.int32),
            grid_spec=pltpu.PrefetchScalarGridSpec(
                num_scalar_prefetch=0,
                grid=(grid_b, grid_v),
                in_specs=[pl.BlockSpec((b_tile, v_tile), lambda b, k: (b, k))],
                out_specs=pl.BlockSpec((b_tile, 1), lambda b, k: (b, 0)),
                scratch_shapes=[pltpu.VMEM((b_tile, 1), jnp.float32),
                                pltpu.VMEM((b_tile, 1), jnp.int32)],
            ),
            compiler_params=pltpu.CompilerParams(
                dimension_semantics=("parallel", "arbitrary"),
                vmem_limit_bytes=_VMEM_LIMIT_BYTES,
            ),
        )(x2d)

    return token.reshape(*lead, 1) if lead else token.reshape(1)


# ---------------------------------------------------------------------------
if __name__ == "__main__":
    key = jax.random.PRNGKey(0)
    k1, k2, k3 = jax.random.split(key, 3)

    # 1) Small f32 case -> grid-less path (whole logits resident in VMEM).
    logits_small = jax.random.normal(k1, (2, 8, 512), jnp.float32)
    tok_small = greedy_head(logits_small)

    # 2) bf16 logits with a ragged vocab (5000 % 128 != 0) -> tiled reduction
    #    path with in-kernel tail masking, native-dtype streaming, no pad copy.
    #    (forced onto the tiled path with gridless_max_bytes=0 to exercise it
    #     at small test shapes)
    logits_rag = (3.0 * jax.random.normal(k2, (4, 8, 5000), jnp.float32)
                  ).astype(jnp.bfloat16)
    tok_rag = greedy_head(logits_rag, gridless_max_bytes=0)

    # 3) Flattened batch larger than the batch tile -> batch-tiled "parallel"
    #    axis with a partial last batch block.
    logits_bt = jax.random.normal(k3, (520, 384), jnp.float32)
    tok_bt = greedy_head(logits_bt, gridless_max_bytes=0)

    jax.block_until_ready((tok_small, tok_rag, tok_bt))

    # Reference: jnp.argmax also returns the first index attaining the max.
    ref_small = jnp.argmax(logits_small.astype(jnp.float32), axis=-1)[..., None]
    ref_rag = jnp.argmax(logits_rag.astype(jnp.float32), axis=-1)[..., None]
    ref_bt = jnp.argmax(logits_bt.astype(jnp.float32), axis=-1)[..., None]

    assert tok_small.shape == (2, 8, 1) and tok_small.dtype == jnp.int32
    assert tok_rag.shape == (4, 8, 1) and tok_rag.dtype == jnp.int32
    assert tok_bt.shape == (520, 1) and tok_bt.dtype == jnp.int32
    assert bool(jnp.all(tok_small == ref_small.astype(jnp.int32)))
    assert bool(jnp.all(tok_rag == ref_rag.astype(jnp.int32)))
    assert bool(jnp.all(tok_bt == ref_bt.astype(jnp.int32)))

    print("KERNEL_OK")
</pallas_src>

<mosaic_0001>
module attributes {stable_mosaic.version = 11 : i64} {
  func.func @_greedy_full_kernel(%arg0: memref<16x512xf32, #tpu.memory_space<vmem>>, %arg1: memref<16x1xi32, #tpu.memory_space<vmem>>) attributes {dimension_semantics = [], scalar_prefetch = 0 : i64, scratch_operands = 0 : i64, tpu.core_type = #tpu.core_type<tc>} {
    %c0 = arith.constant 0 : index
    %c0_0 = arith.constant 0 : index
    %0 = vector.load %arg0[%c0, %c0_0] : memref<16x512xf32, #tpu.memory_space<vmem>>, vector<16x512xf32>
    %cst = arith.constant dense<0xFF800000> : vector<16xf32>
    %1 = vector.multi_reduction <maximumf>, %0, %cst [1] : vector<16x512xf32> to vector<16xf32>
    %2 = vector.shape_cast %1 : vector<16xf32> to vector<16x1xf32>
    %3 = tpu.iota {dimensions = array<i32: 1>} : vector<16x512xi32>
    %4 = arith.sitofp %3 : vector<16x512xi32> to vector<16x512xf32>
    %5 = vector.broadcast %2 : vector<16x1xf32> to vector<16x512xf32>
    %6 = arith.cmpf oeq, %0, %5 : vector<16x512xf32>
    %cst_1 = arith.constant 0x7F800000 : f32
    %7 = vector.broadcast %cst_1 : f32 to vector<16x512xf32>
    %8 = arith.select %6, %4, %7 : vector<16x512xi1>, vector<16x512xf32>
    %cst_2 = arith.constant dense<0x7F800000> : vector<16xf32>
    %9 = vector.multi_reduction <minimumf>, %8, %cst_2 [1] : vector<16x512xf32> to vector<16xf32>
    %10 = vector.shape_cast %9 : vector<16xf32> to vector<16x1xf32>
    %11 = arith.fptosi %10 : vector<16x1xf32> to vector<16x1xi32>
    %c0_3 = arith.constant 0 : index
    %c0_4 = arith.constant 0 : index
    %12 = vector.load %arg1[%c0_3, %c0_4] : memref<16x1xi32, #tpu.memory_space<vmem>>, vector<16x1xi32>
    tpu.vector_store %arg1[%c0_3, %c0_4], %11 {strides = array<i32>} : memref<16x1xi32, #tpu.memory_space<vmem>>, vector<16x1xi32>,
    return
  }
}

</mosaic_0001>

<llo_original>
// kernel: tpu_custom_call.1
$region0: #{tpu_custom_call.1}
  #allocation0 [shape = 'u32[]', space=smem, size = 0x4, offset = 0x4, fixed_abs, tag = 'smem constant byte address 0x4 - core index']
  #allocation1 [shape = 'u32[144,128]{1,0:T(1,128)}', space=vmem, size = 0x12000, scoped, tag = 'internal scratch']
  %s0 = inlined_call_operand.hbm [shape: f32[16,512], index: 0, kind: input, shape index: {}]
  %s1 = inlined_call_operand.vmem [shape: s32[16,1], index: 1, kind: output, shape index: {}]
  %s2 = sld [smem:[#allocation0]]
  $region18: #{tpu_custom_call.1} parent=0
    _
  %s4 = ssub.s32 1, %s2
  %s5 = scalar_select 0, %s4, %s2
  $region1: #{tpu_custom_call.1} parent=0
    #allocation2 [shape = 'u8[32768]{0}', space=vmem, size = 0x8000, scoped, tag = 'input window, operand 0, single buffered']
    #allocation3 [shape = 's32[1]{0}', space=sflag, size = 0x4, scoped, tag = 'scoped memory for tpu_custom_call.1']
    %6 = vsyncpa [#allocation3], 0
    // Predicated region
    $region2: #{tpu_custom_call.1} parent=1 // pred_check
      _
    $region3: #{tpu_custom_call.1} parent=1 // pred_check_branch
      %8 = sbr.rel (0) target = $region5
    $region4: #{tpu_custom_call.1} parent=1 // pred_region
      %s10 = ssub.s32 1024, 1024
      %11 = vsyncadd [#allocation3], %s10
      %s12 = sshll.u32 [#allocation2], 4
      %s13 = int_to_ptr.vmem [resolvable:$true] %s12
      %18 = dma.hbm_to_vmem [thread:$0]  %s0, 1024, %s13, [#allocation3], 512, 512, 32
    $region5: #{tpu_custom_call.1} parent=1 // pred_fallthru
      _
    // Predicated region
    $region6: #{tpu_custom_call.1} parent=1 // pred_check
      _
    $region7: #{tpu_custom_call.1} parent=1 // pred_check_branch
      %20 = sbr.rel (0) target = $region9
    $region8: #{tpu_custom_call.1} parent=1 // pred_region
      %21 = dma.done [#allocation3], 1024
    $region9: #{tpu_custom_call.1} parent=1 // pred_fallthru
      _
    %v22 = vld [vmem:[#allocation2] sm:$0xff]
    %v23 = vld [vmem:[#allocation2 + $0x8] sm:$0xff]
    %v24 = vld [vmem:[#allocation2 + $0x10] sm:$0xff]
    %v25 = vld [vmem:[#allocation2 + $0x18] sm:$0xff]
    %v26 = vld [vmem:[#allocation2 + $0x20] sm:$0xff]
    %v27 = vld [vmem:[#allocation2 + $0x28] sm:$0xff]
    %v28 = vld [vmem:[#allocation2 + $0x30] sm:$0xff]
    %v29 = vld [vmem:[#allocation2 + $0x38] sm:$0xff]
    %v30 = vmax.f32 %v22, %v24
    %v31 = vmax.f32 %v23, %v25
    %v32 = vmax.f32 %v30, %v31
    %33 = vmax.xlane.f32.xlu0 %v32
    %v34 = vpop.xlane.xlu0 %33
    %v35 = vmax.f32 %v26, %v28
    %v36 = vmax.f32 %v27, %v29
    %v37 = vmax.f32 %v35, %v36
    %38 = vmax.xlane.f32.xlu0 %v37
    %v39 = vpop.xlane.xlu0 %38
    %v40 = vlaneseq
    %v41 = vand.u32 %v40, 127
    %v42 = vadd.s32 %v41, 128
    %v43 = vadd.s32 %v41, 256
    %v44 = vadd.s32 %v41, 384
    %v45 = vcvt.s32.f32 %v41
    %v46 = vcvt.s32.f32 %v42
    %v47 = vcvt.s32.f32 %v43
    %v48 = vcvt.s32.f32 %v44
    %vm49 = vcmp.eq.f32.partialorder %v22, %v34
    %vm50 = vcmp.eq.f32.partialorder %v23, %v34
    %vm51 = vcmp.eq.f32.partialorder %v24, %v34
    %vm52 = vcmp.eq.f32.partialorder %v25, %v34
    %vm53 = vcmp.eq.f32.partialorder %v26, %v39
    %vm54 = vcmp.eq.f32.partialorder %v27, %v39
    %vm55 = vcmp.eq.f32.partialorder %v28, %v39
    %vm56 = vcmp.eq.f32.partialorder %v29, %v39
    %v57 = vsel %vm49, %v45, inf
    %v58 = vsel %vm50, %v46, inf
    %v59 = vsel %vm51, %v47, inf
    %v60 = vsel %vm52, %v48, inf
    %v61 = vsel %vm53, %v45, inf
    %v62 = vsel %vm54, %v46, inf
    %v63 = vsel %vm55, %v47, inf
    %v64 = vsel %vm56, %v48, inf
    %v65 = vmin.f32 %v57, %v59
    %v66 = vmin.f32 %v58, %v60
    %v67 = vmin.f32 %v65, %v66
    %68 = vmin.xlane.f32.xlu0 %v67
    %v69 = vpop.xlane.xlu0 %68
    %v70 = vmin.f32 %v61, %v63
    %v71 = vmin.f32 %v62, %v64
    %v72 = vmin.f32 %v70, %v71
    %73 = vmin.xlane.f32.xlu0 %v72
    %v74 = vpop.xlane.xlu0 %73
    %v75 = vcvt.f32.s32.to.zero.pseudo %v69
    %v76 = vcvt.f32.s32.to.zero.pseudo %v74
    %vm77 = vcmask 7168
    %78 = vst.msk [vmem:[%s1] sm:$0xff] %vm77, %v75
    %79 = vst.msk [vmem:[%s1 + $0x8] sm:$0xff] %vm77, %v76
    // Predicated region
    $region10: #{tpu_custom_call.1} parent=1 // pred_check
      _
    $region11: #{tpu_custom_call.1} parent=1 // pred_check_branch
      %81 = sbr.rel (0) target = $region13
    $region12: #{tpu_custom_call.1} parent=1 // pred_region
      _
    $region13: #{tpu_custom_call.1} parent=1 // pred_fallthru
      _
    // Predicated region
    $region14: #{tpu_custom_call.1} parent=1 // pred_check
      _
    $region15: #{tpu_custom_call.1} parent=1 // pred_check_branch
      %83 = sbr.rel (0) target = $region17
    $region16: #{tpu_custom_call.1} parent=1 // pred_region
      _
    $region17: #{tpu_custom_call.1} parent=1 // pred_fallthru
      _
    %84 = vsyncpa [#allocation3], 1

</llo_original>
